<compile_context>
chip_gen: v5e
topology: v5e:2x2
jax: 0.10.0
libtpu: 0.0.40
codegen_flags: <defaults>
</compile_context>

<pallas_src>
import functools

import jax
import jax.numpy as jnp
import numpy as np
from jax import lax
from jax.experimental import pallas as pl
from jax.experimental.pallas import tpu as pltpu

EPS = 1e-5


def _fused_up_tcn_kernel(sa_ref, x_ref, w1s_ref, w1x_ref, w2_ref, bn_ref, o_ref, *, Ls):
    f32 = jnp.float32
    Tm, C2 = o_ref.shape
    C = C2 // 2
    C3 = 3 * C

    dot = functools.partial(jnp.dot, preferred_element_type=f32)

    # Within-sample boundary masks rebuilt from the static pair count Ls:
    # each block holds whole samples, so row r is pair t = r % Ls of its sample.
    tpos = lax.broadcasted_iota(jnp.int32, (Tm, 1), 0) % Ls
    mf = jnp.where(tpos != 0, 1.0, 0.0).astype(f32)        # row is NOT pair 0
    ml = jnp.where(tpos != Ls - 1, 1.0, 0.0).astype(f32)   # row is NOT pair Ls-1

    def shift_down(v):              # v_prev[i] = v[i-1]; top row zeroed (masked anyway)
        return jnp.concatenate([jnp.zeros_like(v[:1]), v[:-1]], axis=0)

    def shift_up(v):                # v_next[i] = v[i+1]; bottom row zeroed (masked anyway)
        return jnp.concatenate([v[1:], jnp.zeros_like(v[:1])], axis=0)

    def silu(y):                    # y * sigmoid(y) with a single EUP transcendental
        return 0.5 * y * (jnp.tanh(0.5 * y) + 1.0)

    sa = sa_ref[...].astype(f32)    # (Tm, Cin+1)  [skip | 1]  (ones lane folds ConvT bias)
    x = x_ref[...].astype(f32)      # (Tm, 2C)     [even position | odd position]
    bn = bn_ref[...].astype(f32)    # (4, 2C)      rows: sc1, sh1, sc2, sh2 (parity-tiled)

    # ---- conv1 (k=3, pad=1) over cat([x, up]); ConvTranspose1d folded into w1s ----
    # q[:, :3C] are the 3 tap contributions for even outputs, q[:, 3C:] for odd outputs.
    q = dot(sa, w1s_ref[...]) + dot(x, w1x_ref[...])                      # (Tm, 6C)
    y1e = mf * shift_down(q[:, C3:C3 + C]) + q[:, C:2 * C] + q[:, C3 + 2 * C:]
    y1o = q[:, :C] + q[:, C3 + C:C3 + 2 * C] + ml * shift_up(q[:, 2 * C:C3])
    h1 = silu(jnp.concatenate([y1e, y1o], axis=1) * bn[0:1] + bn[1:2])    # (Tm, 2C)

    # ---- conv2 (k=3, pad=1), same tap-fused structure, parities share one matmul ----
    r = dot(h1, w2_ref[...])                                              # (Tm, 6C)
    y2e = mf * shift_down(r[:, C3:C3 + C]) + r[:, C:2 * C] + r[:, C3 + 2 * C:]
    y2o = r[:, :C] + r[:, C3 + C:C3 + 2 * C] + ml * shift_up(r[:, 2 * C:C3])
    h2 = silu(jnp.concatenate([y2e, y2o], axis=1) * bn[2:3] + bn[3:4])

    o_ref[...] = h2.astype(o_ref.dtype)      # one lane-dense full-width store


def _pick_block_batch(B, Ls, row_bytes, budget_bytes=12 << 20):
    """Samples per grid block: whole samples only, sublane-friendly rows, ~budget/block."""
    valid = [bb for bb in range(1, B + 1)
             if B % bb == 0 and ((bb * Ls) % 8 == 0 or bb == B)]
    fitting = [bb for bb in valid if bb * Ls * row_bytes <= budget_bytes] or [min(valid)]
    best = max(fitting)
    # Prefer an even number of grid steps (balances v7x's 2 TensorCores) unless that
    # would shrink the block by more than 2x (v5e/v6e: extra steps are just overhead).
    even_steps = [bb for bb in fitting if (B // bb) % 2 == 0]
    if even_steps and 2 * max(even_steps) >= best:
        return max(even_steps)
    return best


def _fused_layer(x_blc, s_blc, p):
    """One TCNUnetUp layer (upsample + concat + TCNBlock) in a single pallas_call.

    x_blc: (B, L, C) channels-last activation; s_blc: (B, Ls, Cin) skip; L == 2*Ls.
    """
    B, L, C = x_blc.shape
    _, Ls, Cin = s_blc.shape
    assert L == 2 * Ls
    Mtot = B * Ls
    f32 = jnp.float32

    # ---- parameter re-layout / folding (once per layer, plain XLA) ----
    # W1: (C, 2C, 3) -> (2C, 3C) with column block k = W1[:, :, k].T
    W1cat = jnp.transpose(p['W1'], (1, 2, 0)).reshape(2 * C, 3 * C)
    W1x3 = W1cat[:C].astype(f32)                      # x-channel rows (cat order: x first)
    W1u3 = W1cat[C:].astype(f32)                      # up-channel rows
    Ae = p['Wt'][:, :, 0] @ W1u3                      # ConvTranspose tap 0 folded into conv1
    Ao = p['Wt'][:, :, 1] @ W1u3                      # ConvTranspose tap 1 folded into conv1
    Kup = p['bt'][None, :] @ W1u3                     # ConvTranspose bias through conv1
    W1s = jnp.concatenate(                            # (Cin+1, 6C): [Ae|Ao] + bias row
        [jnp.concatenate([Ae, Ao], axis=1),
         jnp.concatenate([Kup, Kup], axis=1)], axis=0).astype(f32)
    zc = jnp.zeros((C, 3 * C), f32)
    W1x_bd = jnp.concatenate(                         # (2C, 6C) block-diag over parity
        [jnp.concatenate([W1x3, zc], axis=1),
         jnp.concatenate([zc, W1x3], axis=1)], axis=0)
    W2cat = jnp.transpose(p['W2'], (1, 2, 0)).reshape(C, 3 * C).astype(f32)
    W2_bd = jnp.concatenate(                          # (2C, 6C) block-diag over parity
        [jnp.concatenate([W2cat, zc], axis=1),
         jnp.concatenate([zc, W2cat], axis=1)], axis=0)

    sc1 = p['g1'] / jnp.sqrt(p['rv1'] + EPS)
    sh1 = p['be1'] + (p['b1'] - p['rm1']) * sc1       # conv1 bias folded into BN shift
    sc2 = p['g2'] / jnp.sqrt(p['rv2'] + EPS)
    sh2 = p['be2'] + (p['b2'] - p['rm2']) * sc2
    BN = jnp.stack([jnp.concatenate([v, v]) for v in (sc1, sh1, sc2, sh2)],
                   axis=0).astype(f32)                # (4, 2C) parity-tiled scale/shift

    # free row-major views: row (b,t) holds positions 2t | 2t+1 in its 2C lanes
    x2d = x_blc.reshape(Mtot, 2 * C)
    s2d = s_blc.reshape(Mtot, Cin)
    sa = jnp.concatenate([s2d, jnp.ones((Mtot, 1), s2d.dtype)], axis=1)  # (Mtot, Cin+1)

    # block sizing: double-buffered streamed rows (sa, x, out) + in-kernel intermediates
    row_bytes = 4 * (2 * (Cin + 1 + 4 * C) + 20 * C)
    bb = _pick_block_batch(B, Ls, row_bytes)
    Tm = bb * Ls
    grid = (Mtot // Tm,)

    def row_spec(shape):
        return pl.BlockSpec(shape, lambda i: (i, 0))

    def full_spec(shape):
        return pl.BlockSpec(shape, lambda i: (0, 0))

    out = pl.pallas_call(
        functools.partial(_fused_up_tcn_kernel, Ls=Ls),
        out_shape=jax.ShapeDtypeStruct((Mtot, 2 * C), x_blc.dtype),
        grid=grid,
        in_specs=[
            row_spec((Tm, Cin + 1)),        # [skip | 1] rows
            row_spec((Tm, 2 * C)),          # x rows (even|odd)
            full_spec((Cin + 1, 6 * C)),    # conv1 ∘ convT composite (both parities) + bias row
            full_spec((2 * C, 6 * C)),      # conv1 x-path, block-diag over parity
            full_spec((2 * C, 6 * C)),      # conv2 weights, block-diag over parity
            full_spec((4, 2 * C)),          # BN1/BN2 scale & shift (conv biases folded)
        ],
        out_specs=row_spec((Tm, 2 * C)),
        compiler_params=pltpu.CompilerParams(
            dimension_semantics=("parallel",),
            vmem_limit_bytes=48 * 1024 * 1024),
    )(sa, x2d, W1s, W1x_bd, W2_bd, BN)

    return out.reshape(B, L, C)


def tcn_unet_up_forward(x, sampel, params_list):
    """Pallas TCNUnetUp.forward. x: (B, out_ch, L); sampel: list, used elems (B, in_ch, L/2)."""
    x_blc = jnp.transpose(x, (0, 2, 1))               # NCL -> NLC once at entry
    sampel = list(sampel)
    for layer, p in enumerate(params_list):
        s_blc = jnp.transpose(sampel[-(layer + 1)], (0, 2, 1))
        x_blc = _fused_layer(x_blc, s_blc, p)
    return jnp.transpose(x_blc, (0, 2, 1))            # NLC -> NCL once at exit


# ---------------- pure-JAX reference (same eval-mode semantics) ----------------
def _bn_eval(y, g, b, rm, rv):
    return (y - rm[None, :, None]) / jnp.sqrt(rv + EPS)[None, :, None] * g[None, :, None] \
        + b[None, :, None]


def _conv1d_same(x, w, b):
    y = lax.conv_general_dilated(x, w, (1,), [(1, 1)],
                                 dimension_numbers=('NCH', 'OIH', 'NCH'))
    return y + b[None, :, None]


def _ref_forward(x, sampel, params_list):
    sampel = list(sampel)
    for layer, p in enumerate(params_list):
        s = sampel[-(layer + 1)]                          # (B, Cin, Ls)
        up = jnp.einsum('bct,cok->botk', s, p['Wt'])      # (B, Cout, Ls, 2)
        B, Cout, Ls, _ = up.shape
        up = up.reshape(B, Cout, 2 * Ls) + p['bt'][None, :, None]
        cat = jnp.concatenate([x, up], axis=1)
        y1 = _bn_eval(_conv1d_same(cat, p['W1'], p['b1']),
                      p['g1'], p['be1'], p['rm1'], p['rv1'])
        h1 = jax.nn.silu(y1)
        y2 = _bn_eval(_conv1d_same(h1, p['W2'], p['b2']),
                      p['g2'], p['be2'], p['rm2'], p['rv2'])
        x = jax.nn.silu(y2)
    return x


# ---------------- deterministic parameter init ----------------
def init_params(key, in_channels, out_channels, num_layers=2):
    params_list = []
    C = out_channels
    for layer in range(num_layers - 1):
        ks = jax.random.split(jax.random.fold_in(key, layer), 14)
        p = dict(
            Wt=0.1 * jax.random.normal(ks[0], (in_channels, C, 2), jnp.float32),
            bt=0.05 * jax.random.normal(ks[1], (C,), jnp.float32),
            W1=0.1 * jax.random.normal(ks[2], (C, 2 * C, 3), jnp.float32),
            b1=0.05 * jax.random.normal(ks[3], (C,), jnp.float32),
            g1=1.0 + 0.1 * jax.random.normal(ks[4], (C,), jnp.float32),
            be1=0.05 * jax.random.normal(ks[5], (C,), jnp.float32),
            rm1=0.02 * jax.random.normal(ks[6], (C,), jnp.float32),
            rv1=1.0 + 0.1 * jnp.abs(jax.random.normal(ks[7], (C,), jnp.float32)),
            W2=0.1 * jax.random.normal(ks[8], (C, C, 3), jnp.float32),
            b2=0.05 * jax.random.normal(ks[9], (C,), jnp.float32),
            g2=1.0 + 0.1 * jax.random.normal(ks[10], (C,), jnp.float32),
            be2=0.05 * jax.random.normal(ks[11], (C,), jnp.float32),
            rm2=0.02 * jax.random.normal(ks[12], (C,), jnp.float32),
            rv2=1.0 + 0.1 * jnp.abs(jax.random.normal(ks[13], (C,), jnp.float32)),
        )
        params_list.append(p)
    return params_list


if __name__ == "__main__":
    key = jax.random.PRNGKey(0)
    B, in_ch, out_ch, Ls, num_layers = 2, 4, 8, 8, 2
    L = 2 * Ls

    kx, ksamp, kp = jax.random.split(key, 3)
    x = jax.random.normal(kx, (B, out_ch, L), jnp.float32)            # PyTorch NCL layout
    sampel = [jax.random.normal(ksamp, (B, in_ch, Ls), jnp.float32)]  # skip connection
    params = init_params(kp, in_ch, out_ch, num_layers)

    out = tcn_unet_up_forward(x, sampel, params)
    out = jax.block_until_ready(out)
    assert out.shape == (B, out_ch, L)

    ref = _ref_forward(x, sampel, params)
    np.testing.assert_allclose(np.asarray(out), np.asarray(ref), rtol=1e-4, atol=1e-4)

    print("KERNEL_OK")
</pallas_src>

<mosaic_0001>
module attributes {stable_mosaic.version = 11 : i64} {
  func.func @_fused_up_tcn_kernel(%arg0: i32, %arg1: memref<8x5xf32, #tpu.memory_space<vmem>>, %arg2: memref<8x16xf32, #tpu.memory_space<vmem>>, %arg3: memref<5x48xf32, #tpu.memory_space<vmem>>, %arg4: memref<16x48xf32, #tpu.memory_space<vmem>>, %arg5: memref<16x48xf32, #tpu.memory_space<vmem>>, %arg6: memref<4x16xf32, #tpu.memory_space<vmem>>, %arg7: memref<8x16xf32, #tpu.memory_space<vmem>>) attributes {dimension_semantics = [#tpu.dimension_semantics<parallel>], iteration_bounds = array<i64: 2>, scalar_prefetch = 0 : i64, scratch_operands = 0 : i64, tpu.core_type = #tpu.core_type<tc>, window_params = [{transform_indices = @transform_0, window_bounds = array<i64: 8, 5>}, {transform_indices = @transform_1, window_bounds = array<i64: 8, 16>}, {pipeline_mode = #tpu.pipeline_mode<synchronous>, transform_indices = @transform_2, window_bounds = array<i64: 5, 48>}, {pipeline_mode = #tpu.pipeline_mode<synchronous>, transform_indices = @transform_3, window_bounds = array<i64: 16, 48>}, {pipeline_mode = #tpu.pipeline_mode<synchronous>, transform_indices = @transform_4, window_bounds = array<i64: 16, 48>}, {pipeline_mode = #tpu.pipeline_mode<synchronous>, transform_indices = @transform_5, window_bounds = array<i64: 4, 16>}, {transform_indices = @transform_6, window_bounds = array<i64: 8, 16>}]} {
    %0 = tpu.iota {dimensions = array<i32: 0>} : vector<8x1xi32>
    %c8_i32 = arith.constant 8 : i32
    %c0_i32 = arith.constant 0 : i32
    %1 = arith.cmpi eq, %c8_i32, %c0_i32 : i32
    %c1_i32 = arith.constant 1 : i32
    %2 = arith.select %1, %c1_i32, %c8_i32 : i32
    %3 = vector.broadcast %2 : i32 to vector<8x1xi32>
    %4 = arith.remsi %0, %3 : vector<8x1xi32>
    %c0_i32_0 = arith.constant 0 : i32
    %5 = vector.broadcast %c0_i32_0 : i32 to vector<8x1xi32>
    %6 = arith.cmpi ne, %4, %5 : vector<8x1xi32>
    %c0_i32_1 = arith.constant 0 : i32
    %7 = vector.broadcast %c0_i32_1 : i32 to vector<8x1xi32>
    %8 = arith.cmpi slt, %4, %7 : vector<8x1xi32>
    %c0_i32_2 = arith.constant 0 : i32
    %9 = arith.cmpi slt, %2, %c0_i32_2 : i32
    %10 = vector.broadcast %9 : i1 to vector<8x1xi1>
    %11 = vector.broadcast %10 : vector<8x1xi1> to vector<8x1xi1>
    %12 = arith.xori %8, %11 : vector<8x1xi1>
    %13 = arith.andi %12, %6 : vector<8x1xi1>
    %14 = vector.broadcast %2 : i32 to vector<8x1xi32>
    %15 = arith.addi %4, %14 : vector<8x1xi32>
    %16 = arith.select %13, %15, %4 : vector<8x1xi1>, vector<8x1xi32>
    %c0_i32_3 = arith.constant 0 : i32
    %17 = vector.broadcast %c0_i32_3 : i32 to vector<8x1xi32>
    %18 = arith.cmpi ne, %16, %17 : vector<8x1xi32>
    %cst = arith.constant 1.000000e+00 : f32
    %cst_4 = arith.constant 0.000000e+00 : f32
    %19 = vector.broadcast %cst : f32 to vector<8x1xf32>
    %20 = vector.broadcast %cst_4 : f32 to vector<8x1xf32>
    %21 = arith.select %18, %19, %20 : vector<8x1xi1>, vector<8x1xf32>
    %c7_i32 = arith.constant 7 : i32
    %22 = vector.broadcast %c7_i32 : i32 to vector<8x1xi32>
    %23 = arith.cmpi ne, %16, %22 : vector<8x1xi32>
    %cst_5 = arith.constant 1.000000e+00 : f32
    %cst_6 = arith.constant 0.000000e+00 : f32
    %24 = vector.broadcast %cst_5 : f32 to vector<8x1xf32>
    %25 = vector.broadcast %cst_6 : f32 to vector<8x1xf32>
    %26 = arith.select %23, %24, %25 : vector<8x1xi1>, vector<8x1xf32>
    %c0 = arith.constant 0 : index
    %c0_7 = arith.constant 0 : index
    %27 = vector.load %arg1[%c0, %c0_7] : memref<8x5xf32, #tpu.memory_space<vmem>>, vector<8x5xf32>
    %c0_8 = arith.constant 0 : index
    %c0_9 = arith.constant 0 : index
    %28 = vector.load %arg2[%c0_8, %c0_9] : memref<8x16xf32, #tpu.memory_space<vmem>>, vector<8x16xf32>
    %c0_10 = arith.constant 0 : index
    %c0_11 = arith.constant 0 : index
    %29 = vector.load %arg6[%c0_10, %c0_11] : memref<4x16xf32, #tpu.memory_space<vmem>>, vector<4x16xf32>
    %c0_12 = arith.constant 0 : index
    %c0_13 = arith.constant 0 : index
    %30 = vector.load %arg3[%c0_12, %c0_13] : memref<5x48xf32, #tpu.memory_space<vmem>>, vector<5x48xf32>
    %cst_14 = arith.constant dense<0.000000e+00> : vector<8x48xf32>
    %31 = tpu.matmul %27, %30, %cst_14 {dimension_numbers = #tpu.dot_dimension_numbers<[1], [0], [0], [1], [0, 0, 1, 1], [], []>} : vector<8x5xf32>, vector<5x48xf32>, vector<8x48xf32> -> vector<8x48xf32>
    %c0_15 = arith.constant 0 : index
    %c0_16 = arith.constant 0 : index
    %32 = vector.load %arg4[%c0_15, %c0_16] : memref<16x48xf32, #tpu.memory_space<vmem>>, vector<16x48xf32>
    %cst_17 = arith.constant dense<0.000000e+00> : vector<8x48xf32>
    %33 = tpu.matmul %28, %32, %cst_17 {dimension_numbers = #tpu.dot_dimension_numbers<[1], [0], [0], [1], [0, 0, 1, 1], [], []>} : vector<8x16xf32>, vector<16x48xf32>, vector<8x48xf32> -> vector<8x48xf32>
    %34 = arith.addf %31, %33 : vector<8x48xf32>
    %35 = vector.extract_strided_slice %34 {offsets = [0, 24], sizes = [8, 8], strides = [1, 1]} : vector<8x48xf32> to vector<8x8xf32>
    %cst_18 = arith.constant 0.000000e+00 : f32
    %36 = vector.broadcast %cst_18 : f32 to vector<1x8xf32>
    %37 = vector.extract_strided_slice %35 {offsets = [0, 0], sizes = [7, 8], strides = [1, 1]} : vector<8x8xf32> to vector<7x8xf32>
    %38 = tpu.concatenate %36, %37 in 0 : vector<1x8xf32>, vector<7x8xf32> -> vector<8x8xf32>
    %39 = vector.broadcast %21 : vector<8x1xf32> to vector<8x8xf32>
    %40 = arith.mulf %39, %38 : vector<8x8xf32>
    %41 = vector.extract_strided_slice %34 {offsets = [0, 8], sizes = [8, 8], strides = [1, 1]} : vector<8x48xf32> to vector<8x8xf32>
    %42 = arith.addf %40, %41 : vector<8x8xf32>
    %43 = vector.extract_strided_slice %34 {offsets = [0, 40], sizes = [8, 8], strides = [1, 1]} : vector<8x48xf32> to vector<8x8xf32>
    %44 = arith.addf %42, %43 : vector<8x8xf32>
    %45 = vector.extract_strided_slice %34 {offsets = [0, 0], sizes = [8, 8], strides = [1, 1]} : vector<8x48xf32> to vector<8x8xf32>
    %46 = vector.extract_strided_slice %34 {offsets = [0, 32], sizes = [8, 8], strides = [1, 1]} : vector<8x48xf32> to vector<8x8xf32>
    %47 = arith.addf %45, %46 : vector<8x8xf32>
    %48 = vector.extract_strided_slice %34 {offsets = [0, 16], sizes = [8, 8], strides = [1, 1]} : vector<8x48xf32> to vector<8x8xf32>
    %49 = vector.extract_strided_slice %48 {offsets = [1, 0], sizes = [7, 8], strides = [1, 1]} : vector<8x8xf32> to vector<7x8xf32>
    %cst_19 = arith.constant 0.000000e+00 : f32
    %50 = vector.broadcast %cst_19 : f32 to vector<1x8xf32>
    %51 = tpu.concatenate %49, %50 in 0 : vector<7x8xf32>, vector<1x8xf32> -> vector<8x8xf32>
    %52 = vector.broadcast %26 : vector<8x1xf32> to vector<8x8xf32>
    %53 = arith.mulf %52, %51 : vector<8x8xf32>
    %54 = arith.addf %47, %53 : vector<8x8xf32>
    %55 = tpu.concatenate %44, %54 in 1 : vector<8x8xf32>, vector<8x8xf32> -> vector<8x16xf32>
    %56 = vector.extract_strided_slice %29 {offsets = [0, 0], sizes = [1, 16], strides = [1, 1]} : vector<4x16xf32> to vector<1x16xf32>
    %57 = vector.broadcast %56 : vector<1x16xf32> to vector<8x16xf32>
    %58 = arith.mulf %55, %57 : vector<8x16xf32>
    %59 = vector.extract_strided_slice %29 {offsets = [1, 0], sizes = [1, 16], strides = [1, 1]} : vector<4x16xf32> to vector<1x16xf32>
    %60 = vector.broadcast %59 : vector<1x16xf32> to vector<8x16xf32>
    %61 = arith.addf %58, %60 : vector<8x16xf32>
    %cst_20 = arith.constant 5.000000e-01 : f32
    %62 = vector.broadcast %cst_20 : f32 to vector<8x16xf32>
    %63 = arith.mulf %62, %61 : vector<8x16xf32>
    %cst_21 = arith.constant 5.000000e-01 : f32
    %64 = vector.broadcast %cst_21 : f32 to vector<8x16xf32>
    %65 = arith.mulf %64, %61 : vector<8x16xf32>
    %66 = math.tanh %65 : vector<8x16xf32>
    %cst_22 = arith.constant 1.000000e+00 : f32
    %67 = vector.broadcast %cst_22 : f32 to vector<8x16xf32>
    %68 = arith.addf %66, %67 : vector<8x16xf32>
    %69 = arith.mulf %63, %68 : vector<8x16xf32>
    %c0_23 = arith.constant 0 : index
    %c0_24 = arith.constant 0 : index
    %70 = vector.load %arg5[%c0_23, %c0_24] : memref<16x48xf32, #tpu.memory_space<vmem>>, vector<16x48xf32>
    %cst_25 = arith.constant dense<0.000000e+00> : vector<8x48xf32>
    %71 = tpu.matmul %69, %70, %cst_25 {dimension_numbers = #tpu.dot_dimension_numbers<[1], [0], [0], [1], [0, 0, 1, 1], [], []>} : vector<8x16xf32>, vector<16x48xf32>, vector<8x48xf32> -> vector<8x48xf32>
    %72 = vector.extract_strided_slice %71 {offsets = [0, 24], sizes = [8, 8], strides = [1, 1]} : vector<8x48xf32> to vector<8x8xf32>
    %cst_26 = arith.constant 0.000000e+00 : f32
    %73 = vector.broadcast %cst_26 : f32 to vector<1x8xf32>
    %74 = vector.extract_strided_slice %72 {offsets = [0, 0], sizes = [7, 8], strides = [1, 1]} : vector<8x8xf32> to vector<7x8xf32>
    %75 = tpu.concatenate %73, %74 in 0 : vector<1x8xf32>, vector<7x8xf32> -> vector<8x8xf32>
    %76 = vector.broadcast %21 : vector<8x1xf32> to vector<8x8xf32>
    %77 = arith.mulf %76, %75 : vector<8x8xf32>
    %78 = vector.extract_strided_slice %71 {offsets = [0, 8], sizes = [8, 8], strides = [1, 1]} : vector<8x48xf32> to vector<8x8xf32>
    %79 = arith.addf %77, %78 : vector<8x8xf32>
    %80 = vector.extract_strided_slice %71 {offsets = [0, 40], sizes = [8, 8], strides = [1, 1]} : vector<8x48xf32> to vector<8x8xf32>
    %81 = arith.addf %79, %80 : vector<8x8xf32>
    %82 = vector.extract_strided_slice %71 {offsets = [0, 0], sizes = [8, 8], strides = [1, 1]} : vector<8x48xf32> to vector<8x8xf32>
    %83 = vector.extract_strided_slice %71 {offsets = [0, 32], sizes = [8, 8], strides = [1, 1]} : vector<8x48xf32> to vector<8x8xf32>
    %84 = arith.addf %82, %83 : vector<8x8xf32>
    %85 = vector.extract_strided_slice %71 {offsets = [0, 16], sizes = [8, 8], strides = [1, 1]} : vector<8x48xf32> to vector<8x8xf32>
    %86 = vector.extract_strided_slice %85 {offsets = [1, 0], sizes = [7, 8], strides = [1, 1]} : vector<8x8xf32> to vector<7x8xf32>
    %cst_27 = arith.constant 0.000000e+00 : f32
    %87 = vector.broadcast %cst_27 : f32 to vector<1x8xf32>
    %88 = tpu.concatenate %86, %87 in 0 : vector<7x8xf32>, vector<1x8xf32> -> vector<8x8xf32>
    %89 = vector.broadcast %26 : vector<8x1xf32> to vector<8x8xf32>
    %90 = arith.mulf %89, %88 : vector<8x8xf32>
    %91 = arith.addf %84, %90 : vector<8x8xf32>
    %92 = tpu.concatenate %81, %91 in 1 : vector<8x8xf32>, vector<8x8xf32> -> vector<8x16xf32>
    %93 = vector.extract_strided_slice %29 {offsets = [2, 0], sizes = [1, 16], strides = [1, 1]} : vector<4x16xf32> to vector<1x16xf32>
    %94 = vector.broadcast %93 : vector<1x16xf32> to vector<8x16xf32>
    %95 = arith.mulf %92, %94 : vector<8x16xf32>
    %96 = vector.extract_strided_slice %29 {offsets = [3, 0], sizes = [1, 16], strides = [1, 1]} : vector<4x16xf32> to vector<1x16xf32>
    %97 = vector.broadcast %96 : vector<1x16xf32> to vector<8x16xf32>
    %98 = arith.addf %95, %97 : vector<8x16xf32>
    %cst_28 = arith.constant 5.000000e-01 : f32
    %99 = vector.broadcast %cst_28 : f32 to vector<8x16xf32>
    %100 = arith.mulf %99, %98 : vector<8x16xf32>
    %cst_29 = arith.constant 5.000000e-01 : f32
    %101 = vector.broadcast %cst_29 : f32 to vector<8x16xf32>
    %102 = arith.mulf %101, %98 : vector<8x16xf32>
    %103 = math.tanh %102 : vector<8x16xf32>
    %cst_30 = arith.constant 1.000000e+00 : f32
    %104 = vector.broadcast %cst_30 : f32 to vector<8x16xf32>
    %105 = arith.addf %103, %104 : vector<8x16xf32>
    %106 = arith.mulf %100, %105 : vector<8x16xf32>
    %c0_31 = arith.constant 0 : index
    %c0_32 = arith.constant 0 : index
    %107 = vector.load %arg7[%c0_31, %c0_32] : memref<8x16xf32, #tpu.memory_space<vmem>>, vector<8x16xf32>
    tpu.vector_store %arg7[%c0_31, %c0_32], %106 {strides = array<i32>} : memref<8x16xf32, #tpu.memory_space<vmem>>, vector<8x16xf32>,
    return
  }
  func.func @transform_0(%arg0: i32) -> (i32, i32) {
    %c0_i32 = arith.constant 0 : i32
    %c0_i32_0 = arith.constant 0 : i32
    return %arg0, %c0_i32 : i32, i32
  }
  func.func @transform_1(%arg0: i32) -> (i32, i32) {
    %c0_i32 = arith.constant 0 : i32
    %c0_i32_0 = arith.constant 0 : i32
    return %arg0, %c0_i32 : i32, i32
  }
  func.func @transform_2(%arg0: i32) -> (i32, i32) {
    %c0_i32 = arith.constant 0 : i32
    %c0_i32_0 = arith.constant 0 : i32
    %c0_i32_1 = arith.constant 0 : i32
    return %c0_i32, %c0_i32_0 : i32, i32
  }
  func.func @transform_3(%arg0: i32) -> (i32, i32) {
    %c0_i32 = arith.constant 0 : i32
    %c0_i32_0 = arith.constant 0 : i32
    %c0_i32_1 = arith.constant 0 : i32
    return %c0_i32, %c0_i32_0 : i32, i32
  }
  func.func @transform_4(%arg0: i32) -> (i32, i32) {
    %c0_i32 = arith.constant 0 : i32
    %c0_i32_0 = arith.constant 0 : i32
    %c0_i32_1 = arith.constant 0 : i32
    return %c0_i32, %c0_i32_0 : i32, i32
  }
  func.func @transform_5(%arg0: i32) -> (i32, i32) {
    %c0_i32 = arith.constant 0 : i32
    %c0_i32_0 = arith.constant 0 : i32
    %c0_i32_1 = arith.constant 0 : i32
    return %c0_i32, %c0_i32_0 : i32, i32
  }
  func.func @transform_6(%arg0: i32) -> (i32, i32) {
    %c0_i32 = arith.constant 0 : i32
    %c0_i32_0 = arith.constant 0 : i32
    return %arg0, %c0_i32 : i32, i32
  }
}

</mosaic_0001>

<llo_original>
// kernel: tpu_custom_call.1
$region0: #{tpu_custom_call.1}
  #allocation0 [shape = 'u32[]', space=smem, size = 0x4, offset = 0x4, fixed_abs, tag = 'smem constant byte address 0x4 - core index']
  #allocation1 [shape = 'u32[72,128]{1,0:T(1,128)}', space=vmem, size = 0x9000, scoped, tag = 'internal scratch']
  %s0 = inlined_call_operand.vmem [shape: f32[16,5], index: 0, kind: input, shape index: {}]
  %s1 = inlined_call_operand.vmem [shape: f32[16,16], index: 1, kind: input, shape index: {}]
  %s2 = inlined_call_operand.vmem [shape: f32[5,48], index: 2, kind: input, shape index: {}]
  %s3 = inlined_call_operand.hbm [shape: f32[16,48], index: 3, kind: input, shape index: {}]
  %s4 = inlined_call_operand.hbm [shape: f32[16,48], index: 4, kind: input, shape index: {}]
  %s5 = inlined_call_operand.vmem [shape: f32[4,16], index: 5, kind: input, shape index: {}]
  %s6 = inlined_call_operand.hbm [shape: f32[16,16], index: 6, kind: output, shape index: {}]
  %s7 = sld [smem:[#allocation0]]
  $region65: #{tpu_custom_call.1} parent=0
    _
  %s9 = ssub.s32 1, %s7
  %s10 = scalar_select 0, %s9, %s7
  $region1: #{tpu_custom_call.1} parent=0
    #allocation2 [shape = 'u8[8192]{0}', space=vmem, size = 0x2000, scoped, tag = 'input window, operand 3, single buffered']
    #allocation3 [shape = 's32[2]{0}', space=sflag, size = 0x8, scoped, tag = 'scoped memory for tpu_custom_call.1']
    #allocation4 [shape = 's32[2]{0}', space=sflag, size = 0x8, scoped, tag = 'scoped memory for tpu_custom_call.1']
    #allocation5 [shape = 'u8[8192]{0}', space=vmem, size = 0x2000, scoped, tag = 'input window, operand 4, single buffered']
    #allocation6 [shape = 's32[1]{0}', space=sflag, size = 0x4, scoped, tag = 'scoped memory for tpu_custom_call.1']
    #allocation7 [shape = 'u8[8192]{0}', space=vmem, size = 0x2000, scoped, tag = 'output window, operand 0']
    %11 = vsyncpa [#allocation3], 0
    %12 = vsyncpa [#allocation6], 0
    %13 = vsyncpa [#allocation4], 0
    %s14 = scalar_lea.sflag [#allocation4], 1
    %15 = vsyncpa %s14, 0
    loop: start=0, step=1, limit=4
    $region2: #{tpu_custom_call.1} parent=1 // loop_pre_header
      _
    $region3: #{tpu_custom_call.1} parent=1 // loop_header
      %s17 = sphi 0, %s21
      %p18 = scmp.ge.s32.totalorder %s17, 4
      %s27 = sphi 0, %s29
      %s30 = sphi 0, %s27
      %s31 = sphi 0, %s30
      %s47 = sphi 0, %s31
      %s53 = sphi 0, %s55
      %s56 = sphi 0, %s53
      %s57 = sphi 0, %s56
      %s73 = sphi 0, %s57
      %s77 = sphi 0, %s77
      %s79 = sphi 0, %s77
      %s80 = sphi 0, %s79
      %s94 = sphi 0, %s80
      %s98 = sphi 0, %s98
      %s100 = sphi 0, %s98
      %s101 = sphi 0, %s100
      %s115 = sphi 0, %s101
      %s119 = sphi 0, %s119
      %s121 = sphi 0, %s119
      %s122 = sphi 0, %s121
      %s136 = sphi 0, %s122
      %s140 = sphi 0, %s140
      %s142 = sphi 0, %s140
      %s143 = sphi 0, %s142
      %s157 = sphi 0, %s143
      %s163 = sphi 0, %s165
      %s166 = sphi 0, %s163
      %s167 = sphi 0, %s166
      %s183 = sphi 0, %s167
    $region4: #{tpu_custom_call.1} parent=1 // loop_header_branch
      %20 = sbr.rel (%p18) target = $region8
    $region5: #{tpu_custom_call.1} parent=1 // loop_body
      %s22 = ssub.s32 %s17, 1
      %s23 = ssub.s32 %s17, 2
      %s24 = sadd.s32 %s17, 1
      %s25 = ssub.s32 %s17, %s24
      %p26 = scmp.eq.s32.totalorder %s25, 0
      %s28 = sadd.s32 %s27, 1
      %s29 = scalar_select %p26, %s27, %s28
      %p32 = pneg %p26
      %p33 = scmp.eq.s32.totalorder %s17, 1
      %p34 = por %p32, %p33
      %p35 = scmp.ne.s32.totalorder %s27, %s30
      %p36 = scmp.eq.s32.totalorder %s17, 0
      %p37 = por %p35, %p36
      %p38 = scmp.ne.s32.totalorder %s27, %s30
      %p39 = scmp.eq.s32.totalorder %s22, 1
      %p40 = por %p38, %p39
      %p41 = scmp.ne.s32.totalorder %s30, %s31
      %p42 = scmp.eq.s32.totalorder %s22, 0
      %p43 = por %p41, %p42
      %p44 = scmp.ne.s32.totalorder %s30, %s31
      %p45 = scmp.eq.s32.totalorder %s23, 1
      %p46 = por %p44, %p45
      %p48 = scmp.ne.s32.totalorder %s31, %s47
      %p49 = scmp.eq.s32.totalorder %s23, 0
      %p50 = por %p48, %p49
      %s51 = ssub.s32 %s17, %s24
      %p52 = scmp.eq.s32.totalorder %s51, 0
      %s54 = sadd.s32 %s53, 1
      %s55 = scalar_select %p52, %s53, %s54
      %p58 = pneg %p52
      %p59 = scmp.eq.s32.totalorder %s17, 1
      %p60 = por %p58, %p59
      %p61 = scmp.ne.s32.totalorder %s53, %s56
      %p62 = scmp.eq.s32.totalorder %s17, 0
      %p63 = por %p61, %p62
      %p64 = scmp.ne.s32.totalorder %s53, %s56
      %p65 = scmp.eq.s32.totalorder %s22, 1
      %p66 = por %p64, %p65
      %p67 = scmp.ne.s32.totalorder %s56, %s57
      %p68 = scmp.eq.s32.totalorder %s22, 0
      %p69 = por %p67, %p68
      %p70 = scmp.ne.s32.totalorder %s56, %s57
      %p71 = scmp.eq.s32.totalorder %s23, 1
      %p72 = por %p70, %p71
      %p74 = scmp.ne.s32.totalorder %s57, %s73
      %p75 = scmp.eq.s32.totalorder %s23, 0
      %p76 = por %p74, %p75
      %s78 = sadd.s32 %s77, 1
      %p81 = scmp.eq.s32.totalorder %s17, 1
      %p82 = scmp.ne.s32.totalorder %s77, %s79
      %p83 = scmp.eq.s32.totalorder %s17, 0
      %p84 = por %p82, %p83
      %p85 = scmp.ne.s32.totalorder %s77, %s79
      %p86 = scmp.eq.s32.totalorder %s22, 1
      %p87 = por %p85, %p86
      %p88 = scmp.ne.s32.totalorder %s79, %s80
      %p89 = scmp.eq.s32.totalorder %s22, 0
      %p90 = por %p88, %p89
      %p91 = scmp.ne.s32.totalorder %s79, %s80
      %p92 = scmp.eq.s32.totalorder %s23, 1
      %p93 = por %p91, %p92
      %p95 = scmp.ne.s32.totalorder %s80, %s94
      %p96 = scmp.eq.s32.totalorder %s23, 0
      %p97 = por %p95, %p96
      %s99 = sadd.s32 %s98, 1
      %p102 = scmp.eq.s32.totalorder %s17, 1
      %p103 = scmp.ne.s32.totalorder %s98, %s100
      %p104 = scmp.eq.s32.totalorder %s17, 0
      %p105 = por %p103, %p104
      %p106 = scmp.ne.s32.totalorder %s98, %s100
      %p107 = scmp.eq.s32.totalorder %s22, 1
      %p108 = por %p106, %p107
      %p109 = scmp.ne.s32.totalorder %s100, %s101
      %p110 = scmp.eq.s32.totalorder %s22, 0
      %p111 = por %p109, %p110
      %p112 = scmp.ne.s32.totalorder %s100, %s101
      %p113 = scmp.eq.s32.totalorder %s23, 1
      %p114 = por %p112, %p113
      %p116 = scmp.ne.s32.totalorder %s101, %s115
      %p117 = scmp.eq.s32.totalorder %s23, 0
      %p118 = por %p116, %p117
      %s120 = sadd.s32 %s119, 1
      %p123 = scmp.eq.s32.totalorder %s17, 1
      %p124 = scmp.ne.s32.totalorder %s119, %s121
      %p125 = scmp.eq.s32.totalorder %s17, 0
      %p126 = por %p124, %p125
      %p127 = scmp.ne.s32.totalorder %s119, %s121
      %p128 = scmp.eq.s32.totalorder %s22, 1
      %p129 = por %p127, %p128
      %p130 = scmp.ne.s32.totalorder %s121, %s122
      %p131 = scmp.eq.s32.totalorder %s22, 0
      %p132 = por %p130, %p131
      %p133 = scmp.ne.s32.totalorder %s121, %s122
      %p134 = scmp.eq.s32.totalorder %s23, 1
      %p135 = por %p133, %p134
      %p137 = scmp.ne.s32.totalorder %s122, %s136
      %p138 = scmp.eq.s32.totalorder %s23, 0
      %p139 = por %p137, %p138
      %s141 = sadd.s32 %s140, 1
      %p144 = scmp.eq.s32.totalorder %s17, 1
      %p145 = scmp.ne.s32.totalorder %s140, %s142
      %p146 = scmp.eq.s32.totalorder %s17, 0
      %p147 = por %p145, %p146
      %p148 = scmp.ne.s32.totalorder %s140, %s142
      %p149 = scmp.eq.s32.totalorder %s22, 1
      %p150 = por %p148, %p149
      %p151 = scmp.ne.s32.totalorder %s142, %s143
      %p152 = scmp.eq.s32.totalorder %s22, 0
      %p153 = por %p151, %p152
      %p154 = scmp.ne.s32.totalorder %s142, %s143
      %p155 = scmp.eq.s32.totalorder %s23, 1
      %p156 = por %p154, %p155
      %p158 = scmp.ne.s32.totalorder %s143, %s157
      %p159 = scmp.eq.s32.totalorder %s23, 0
      %p160 = por %p158, %p159
      %s161 = ssub.s32 %s17, %s24
      %p162 = scmp.eq.s32.totalorder %s161, 0
      %s164 = sadd.s32 %s163, 1
      %s165 = scalar_select %p162, %s163, %s164
      %p168 = pneg %p162
      %p169 = scmp.eq.s32.totalorder %s17, 1
      %p170 = por %p168, %p169
      %p171 = scmp.ne.s32.totalorder %s163, %s166
      %p172 = scmp.eq.s32.totalorder %s17, 0
      %p173 = por %p171, %p172
      %p174 = scmp.ne.s32.totalorder %s163, %s166
      %p175 = scmp.eq.s32.totalorder %s22, 1
      %p176 = por %p174, %p175
      %p177 = scmp.ne.s32.totalorder %s166, %s167
      %p178 = scmp.eq.s32.totalorder %s22, 0
      %p179 = por %p177, %p178
      %p180 = scmp.ne.s32.totalorder %s166, %s167
      %p181 = scmp.eq.s32.totalorder %s23, 1
      %p182 = por %p180, %p181
      %p184 = scmp.ne.s32.totalorder %s167, %s183
      %p185 = scmp.eq.s32.totalorder %s23, 0
      %p186 = por %p184, %p185
      %p187 = scmp.le.s32.totalorder 1, %s17
      %p188 = scmp.lt.s32.totalorder %s17, 3
      %p189 = pnand %p187, %p188
      %p190 = pneg %p189
      // Predicated region
      $region9: #{tpu_custom_call.1} parent=5 // pred_check
        _
      $region10: #{tpu_custom_call.1} parent=5 // pred_check_branch
        %192 = sbr.rel (%p189) target = $region12
      $region11: #{tpu_custom_call.1} parent=5 // pred_region
        %s193 = ssub.s32 %s17, 1
        // Predicated region
        $region13: #{tpu_custom_call.1} parent=11 // pred_check
          %p194 = pneg %p90
        $region14: #{tpu_custom_call.1} parent=11 // pred_check_branch
          %196 = sbr.rel (%p194) target = $region16
        $region15: #{tpu_custom_call.1} parent=11 // pred_region
          _
        $region16: #{tpu_custom_call.1} parent=11 // pred_fallthru
          _
        // Predicated region
        $region17: #{tpu_custom_call.1} parent=11 // pred_check
          %p197 = pneg %p111
        $region18: #{tpu_custom_call.1} parent=11 // pred_check_branch
          %199 = sbr.rel (%p197) target = $region20
        $region19: #{tpu_custom_call.1} parent=11 // pred_region
          %201 = vsyncadd [#allocation3], 0
          %s202 = sshll.u32 %s3, 4
          %s203 = int_to_ptr.hbm [resolvable:$true] %s202
          %s204 = sshll.u32 [#allocation2], 4
          %s205 = int_to_ptr.vmem [resolvable:$true] %s204
          %210 = dma.hbm_to_vmem [thread:$0]  %s203, 256, %s205, [#allocation3], 128, 128, 8
        $region20: #{tpu_custom_call.1} parent=11 // pred_fallthru
          _
        // Predicated region
        $region21: #{tpu_custom_call.1} parent=11 // pred_check
          %p211 = pneg %p132
        $region22: #{tpu_custom_call.1} parent=11 // pred_check_branch
          %213 = sbr.rel (%p211) target = $region24
        $region23: #{tpu_custom_call.1} parent=11 // pred_region
          %215 = vsyncadd [#allocation6], 0
          %s216 = sshll.u32 %s4, 4
          %s217 = int_to_ptr.hbm [resolvable:$true] %s216
          %s218 = sshll.u32 [#allocation5], 4
          %s219 = int_to_ptr.vmem [resolvable:$true] %s218
          %224 = dma.hbm_to_vmem [thread:$0]  %s217, 256, %s219, [#allocation6], 128, 128, 8
        $region24: #{tpu_custom_call.1} parent=11 // pred_fallthru
          _
        // Predicated region
        $region25: #{tpu_custom_call.1} parent=11 // pred_check
          %p225 = pneg %p153
        $region26: #{tpu_custom_call.1} parent=11 // pred_check_branch
          %227 = sbr.rel (%p225) target = $region28
        $region27: #{tpu_custom_call.1} parent=11 // pred_region
          _
        $region28: #{tpu_custom_call.1} parent=11 // pred_fallthru
          _
      $region12: #{tpu_custom_call.1} parent=5 // pred_fallthru
        _
      %p228 = scmp.lt.s32.totalorder %s17, 2
      // Predicated region
      $region29: #{tpu_custom_call.1} parent=5 // pred_check
        %p229 = pneg %p228
      $region30: #{tpu_custom_call.1} parent=5 // pred_check_branch
        %231 = sbr.rel (%p229) target = $region32
      $region31: #{tpu_custom_call.1} parent=5 // pred_region
        // Predicated region
        $region33: #{tpu_custom_call.1} parent=31 // pred_check
          %p232 = pneg %p37
        $region34: #{tpu_custom_call.1} parent=31 // pred_check_branch
          %234 = sbr.rel (%p232) target = $region36
        $region35: #{tpu_custom_call.1} parent=31 // pred_region
          %p235 = scmp.lt.s32.totalorder %s17, 1
          %s236 = scalar_select %p235, %s17, 1
          %s237 = smul.addr %s236, 8
          %s238 = scalar_lea.vmem %s0, %s237
        $region36: #{tpu_custom_call.1} parent=31 // pred_fallthru
          _
        // Predicated region
        $region37: #{tpu_custom_call.1} parent=31 // pred_check
          %p239 = pneg %p63
        $region38: #{tpu_custom_call.1} parent=31 // pred_check_branch
          %241 = sbr.rel (%p239) target = $region40
        $region39: #{tpu_custom_call.1} parent=31 // pred_region
          %p242 = scmp.lt.s32.totalorder %s17, 1
          %s243 = scalar_select %p242, %s17, 1
          %s244 = smul.addr %s243, 8
          %s245 = scalar_lea.vmem %s1, %s244
        $region40: #{tpu_custom_call.1} parent=31 // pred_fallthru
          _
      $region32: #{tpu_custom_call.1} parent=5 // pred_fallthru
        _
      %p246 = scmp.le.s32.totalorder 1, %s17
      %p247 = scmp.lt.s32.totalorder %s17, 3
      %p248 = pnand %p246, %p247
      %p249 = pneg %p248
      // Predicated region
      $region41: #{tpu_custom_call.1} parent=5 // pred_check
        _
      $region42: #{tpu_custom_call.1} parent=5 // pred_check_branch
        %251 = sbr.rel (%p248) target = $region44
      $region43: #{tpu_custom_call.1} parent=5 // pred_region
        %s252 = ssub.s32 %s17, 1
        // Predicated region
        $region45: #{tpu_custom_call.1} parent=43 // pred_check
          %p253 = pneg %p111
        $region46: #{tpu_custom_call.1} parent=43 // pred_check_branch
          %255 = sbr.rel (%p253) target = $region48
        $region47: #{tpu_custom_call.1} parent=43 // pred_region
          %257 = dma.done [#allocation3], 256
        $region48: #{tpu_custom_call.1} parent=43 // pred_fallthru
          _
        // Predicated region
        $region49: #{tpu_custom_call.1} parent=43 // pred_check
          %p258 = pneg %p132
        $region50: #{tpu_custom_call.1} parent=43 // pred_check_branch
          %260 = sbr.rel (%p258) target = $region52
        $region51: #{tpu_custom_call.1} parent=43 // pred_region
          %262 = dma.done [#allocation6], 256
        $region52: #{tpu_custom_call.1} parent=43 // pred_fallthru
          _
        %p263 = scmp.lt.s32.totalorder %s22, 1
        %s264 = scalar_select %p263, %s22, 1
        %s265 = smul.addr %s264, 8
        %s266 = scalar_lea.vmem %s0, %s265
        %p267 = pneg %p43
        %p268 = pneg %p40
        %p269 = scmp.lt.s32.totalorder %s22, 1
        %s270 = scalar_select %p269, %s22, 1
        %s271 = smul.addr %s270, 8
        %s272 = scalar_lea.vmem %s1, %s271
        %p273 = pneg %p69
        %p274 = pneg %p66
        %p275 = pneg %p90
        %p276 = pneg %p87
        %p277 = pneg %p111
        %p278 = pneg %p108
        %p279 = pneg %p132
        %p280 = pneg %p129
        %p281 = pneg %p153
        %p282 = pneg %p150
        %p283 = pneg %p179
        %p284 = pneg %p176
        %s285 = sand.u32 %s166, 1
        %s286 = scalar_lea.sflag [#allocation4], %s285
        %s287 = sand.u32 %s166, 1
        %s288 = smul.addr %s287, 8
        %s289 = scalar_lea.vmem [#allocation7], %s288
        %p290 = scmp.lt.s32.totalorder %s22, 1
        %s291 = scalar_select %p290, %s22, 1
        %s292 = smul.addr %s291, 8
        %s293 = scalar_lea.vmem %s0, %s292
        %p294 = scmp.lt.s32.totalorder %s22, 1
        %s295 = scalar_select %p294, %s22, 1
        %s296 = smul.addr %s295, 8
        %s297 = scalar_lea.vmem %s1, %s296
        %v298 = vlaneseq
        %v299 = vshrl.u32 %v298, 7
        %vm300 = vcmp.lt.s32.totalorder %v299, 0
        %v301 = vsub.s32 0, %v299
        %v302 = vsel %vm300, %v301, %v299
        %v303 = vshrl.u32 %v302, 3
        %v304 = vand.u32 %v302, 7
        %v305 = vsub.s32 0, %v304
        %v306 = vsel %vm300, %v305, %v304
        %vm307 = vcmp.ne.s32.totalorder %v306, 0
        %vm308 = vcmp.lt.s32.totalorder %v306, 0
        %vm309 = vmand %vm308, %vm307
        %v310 = vadd.s32 %v306, 8
        %v311 = vsel %vm309, %v310, %v306
        %vm312 = vcmp.ne.s32.totalorder %v311, 0
        %v313 = vsel %vm312, 1.0, 0.0
        %vm314 = vcmp.ne.s32.totalorder %v311, 7
        %v315 = vsel %vm314, 1.0, 0.0
        %v316 = vld [vmem:[%s293] sm:$0xff]
        %v317 = vld [vmem:[%s297] sm:$0xff]
        %v318 = vld [vmem:[%s5] sm:$0xf]
        %v319 = vld [vmem:[%s2] sm:$0x1f]
        %v320 = vld [vmem:[#allocation2] sm:$0xff]
        %v321 = vld [vmem:[#allocation2 + $0x8] sm:$0xff]
        %vm322 = vcmask 130048
        %v324 = vsel %vm322, %v317, 0
        %326 = vmatpush.msra.mxu0 0.0
        %327 = vmatpush.msra.mxu0 0.0
        %328 = vmatpush.msra.mxu0 0.0
        %329 = vmatpush.msra.mxu0 0.0
        %330 = vmatpush.msra.mxu0 0.0
        %331 = vmatpush.msra.mxu0 0.0
        %332 = vmatpush.msra.mxu0 0.0
        %333 = vmatpush.msra.mxu0 0.0
        %334 = vmatpush.msra.mxu0 0.0
        %335 = vmatpush.msra.mxu0 0.0
        %336 = vmatpush.msra.mxu0 0.0
        %337 = vmatpush.msra.mxu0 0.0
        %338 = vmatpush.msra.mxu0 0.0
        %339 = vmatpush.msra.mxu0 0.0
        %340 = vmatpush.msra.mxu0 %v321
        %341 = vmatpush.msra.mxu0 %v320
        %342 = vmatmul.f32.gmra.mxu0 %v324
        %v343 = vpop.f32.mrf.mxu0
        %v344 = vadd.f32 0.0, %v343
        %345 = vdwg.mxu0
        %vm346 = vcmask 39936
        %v348 = vsel %vm346, %v316, 0
        %vm350 = vcmask 1044480
        %v352 = vsel %vm350, %v319, 0
        %354 = vmatpush.msra.mxu0 0.0
        %355 = vmatpush.msra.mxu0 0.0
        %356 = vmatpush.msra.mxu0 0.0
        %357 = vmatpush.msra.mxu0 0.0
        %358 = vmatpush.msra.mxu0 0.0
        %359 = vmatpush.msra.mxu0 0.0
        %360 = vmatpush.msra.mxu0 0.0
        %361 = vmatpush.msra.mxu0 0.0
        %362 = vmatpush.msra.mxu0 0.0
        %363 = vmatpush.msra.mxu0 0.0
        %364 = vmatpush.msra.mxu0 0.0
        %365 = vmatpush.msra.mxu0 0.0
        %366 = vmatpush.msra.mxu0 0.0
        %367 = vmatpush.msra.mxu0 0.0
        %368 = vmatpush.msra.mxu0 0.0
        %369 = vmatpush.msra.mxu0 %v352
        %370 = vmatmul.f32.gmra.mxu0 %v348
        %v371 = vpop.f32.mrf.mxu0
        %v372 = vadd.f32 %v344, %v371
        %373 = vdwg.mxu0
        %v375 = vrot.slane %v372, 7
        %376 = vrot.lane.b32.xlu0 %v375, 104
        %v377 = vpop.permute.xlu0 %376
        %vm379 = vcmask 1040384
        %v380 = vsel %vm379, 0.0, %v377
        %v381 = vmul.f32 %v313, %v380
        %382 = vrot.lane.b32.xlu0 %v372, 120
        %v383 = vpop.permute.xlu0 %382
        %v385 = vadd.f32 %v381, %v383
        %386 = vrot.lane.b32.xlu0 %v372, 88
        %v387 = vpop.permute.xlu0 %386
        %v389 = vadd.f32 %v385, %v387
        %390 = vrot.lane.b32.xlu0 %v372, 96
        %v391 = vpop.permute.xlu0 %390
        %v393 = vadd.f32 %v372, %v391
        %v394 = vrot.slane %v372, 1
        %vm396 = vcmask 1046528
        %v397 = vsel %vm396, %v394, 0.0
        %v398 = vmul.f32 %v315, %v397
        %400 = vrot.lane.b32.xlu0 %v398, 112
        %v401 = vpop.permute.xlu0 %400
        %v403 = vadd.f32 %v393, %v401
        %405 = vrot.lane.b32.xlu0 %v403, 8
        %v406 = vpop.permute.xlu0 %405
        %vm408 = vcmask 64512
        %v409 = vsel %vm408, %v389, %v406
        %v410 = vperm.slane %v318, 0
        %v411 = vmul.f32 %v409, %v410
        %v412 = vperm.slane %v318, 1
        %v413 = vadd.f32 %v411, %v412
        %v414 = vmul.f32 %v413, 0.5
        %v415 = vtanh.pop %v414
        %v416 = vadd.f32 %v415, 1.0
        %v417 = vmul.f32 %v414, %v416
        %v418 = vld [vmem:[#allocation5] sm:$0xff]
        %v419 = vld [vmem:[#allocation5 + $0x8] sm:$0xff]
        %v421 = vsel %vm322, %v417, 0
        %423 = vmatpush.msra.mxu0 0.0
        %424 = vmatpush.msra.mxu0 0.0
        %425 = vmatpush.msra.mxu0 0.0
        %426 = vmatpush.msra.mxu0 0.0
        %427 = vmatpush.msra.mxu0 0.0
        %428 = vmatpush.msra.mxu0 0.0
        %429 = vmatpush.msra.mxu0 0.0
        %430 = vmatpush.msra.mxu0 0.0
        %431 = vmatpush.msra.mxu0 0.0
        %432 = vmatpush.msra.mxu0 0.0
        %433 = vmatpush.msra.mxu0 0.0
        %434 = vmatpush.msra.mxu0 0.0
        %435 = vmatpush.msra.mxu0 0.0
        %436 = vmatpush.msra.mxu0 0.0
        %437 = vmatpush.msra.mxu0 %v419
        %438 = vmatpush.msra.mxu0 %v418
        %439 = vmatmul.f32.gmra.mxu0 %v421
        %v440 = vpop.f32.mrf.mxu0
        %v441 = vadd.f32 0.0, %v440
        %442 = vdwg.mxu0
        %v444 = vrot.slane %v441, 7
        %445 = vrot.lane.b32.xlu0 %v444, 104
        %v446 = vpop.permute.xlu0 %445
        %v448 = vsel %vm379, 0.0, %v446
        %v449 = vmul.f32 %v313, %v448
        %450 = vrot.lane.b32.xlu0 %v441, 120
        %v451 = vpop.permute.xlu0 %450
        %v453 = vadd.f32 %v449, %v451
        %454 = vrot.lane.b32.xlu0 %v441, 88
        %v455 = vpop.permute.xlu0 %454
        %v457 = vadd.f32 %v453, %v455
        %458 = vrot.lane.b32.xlu0 %v441, 96
        %v459 = vpop.permute.xlu0 %458
        %v461 = vadd.f32 %v441, %v459
        %v462 = vrot.slane %v441, 1
        %v464 = vsel %vm396, %v462, 0.0
        %v465 = vmul.f32 %v315, %v464
        %467 = vrot.lane.b32.xlu0 %v465, 112
        %v468 = vpop.permute.xlu0 %467
        %v470 = vadd.f32 %v461, %v468
        %472 = vrot.lane.b32.xlu0 %v470, 8
        %v473 = vpop.permute.xlu0 %472
        %v475 = vsel %vm408, %v457, %v473
        %v476 = vperm.slane %v318, 2
        %v477 = vmul.f32 %v475, %v476
        %v478 = vperm.slane %v318, 3
        %v479 = vadd.f32 %v477, %v478
        %v480 = vmul.f32 %v479, 0.5
        %v481 = vtanh.pop %v480
        %v482 = vadd.f32 %v481, 1.0
        %v483 = vmul.f32 %v480, %v482
        %484 = vst.msk [vmem:[%s289] sm:$0xff] %vm322, %v483
        %s485 = sand.u32 %s166, 1
        %s486 = scalar_lea.sflag [#allocation4], %s485
        %s487 = sand.u32 %s166, 1
        %s488 = smul.addr %s487, 8
        %s489 = scalar_lea.vmem [#allocation7], %s488
        // Predicated region
        $region53: #{tpu_custom_call.1} parent=43 // pred_check
          %p490 = pneg %p176
        $region54: #{tpu_custom_call.1} parent=43 // pred_check_branch
          %492 = sbr.rel (%p490) target = $region56
        $region55: #{tpu_custom_call.1} parent=43 // pred_region
          %494 = vsyncadd %s486, 0
          %s495 = smul.addr %s22, 8
          %s496 = scalar_lea.hbm %s6, %s495
          %s498 = sshll.u32 %s489, 4
          %s499 = int_to_ptr.vmem [resolvable:$true] %s498
          %s500 = sshll.u32 %s496, 4
          %s501 = int_to_ptr.hbm [resolvable:$true] %s500
          %503 = dma.vmem_to_hbm [thread:$0]  %s499, 128, %s501, %s486
        $region56: #{tpu_custom_call.1} parent=43 // pred_fallthru
          _
      $region44: #{tpu_custom_call.1} parent=5 // pred_fallthru
        _
      %p504 = scmp.le.s32.totalorder 2, %s17
      // Predicated region
      $region57: #{tpu_custom_call.1} parent=5 // pred_check
        %p505 = pneg %p504
      $region58: #{tpu_custom_call.1} parent=5 // pred_check_branch
        %507 = sbr.rel (%p505) target = $region60
      $region59: #{tpu_custom_call.1} parent=5 // pred_region
        %s508 = ssub.s32 %s17, 2
        // Predicated region
        $region61: #{tpu_custom_call.1} parent=59 // pred_check
          %p509 = pneg %p182
        $region62: #{tpu_custom_call.1} parent=59 // pred_check_branch
          %511 = sbr.rel (%p509) target = $region64
        $region63: #{tpu_custom_call.1} parent=59 // pred_region
          %s512 = sand.u32 %s167, 1
          %s513 = scalar_lea.sflag [#allocation4], %s512
          %s514 = sand.u32 %s167, 1
          %s515 = smul.addr %s514, 8
          %s516 = scalar_lea.vmem [#allocation7], %s515
          %518 = dma.done %s513, 128
        $region64: #{tpu_custom_call.1} parent=59 // pred_fallthru
          _
      $region60: #{tpu_custom_call.1} parent=5 // pred_fallthru
        _
    $region6: #{tpu_custom_call.1} parent=1 // loop_footer
      %s21 = sadd.s32 1, %s17
    $region7: #{tpu_custom_call.1} parent=1 // loop_footer_branch
      %16 = sbr.rel target = $region3
    $region8: #{tpu_custom_call.1} parent=1 // loop_exit
      _
    %519 = vsyncpa [#allocation3], 1
    %s520 = scalar_lea.sflag [#allocation3], 1
    %521 = vsyncpa %s520, 1
    %522 = vsyncpa [#allocation6], 1
    %523 = vsyncpa [#allocation4], 1
    %s524 = scalar_lea.sflag [#allocation4], 1
    %525 = vsyncpa %s524, 1

</llo_original>
